<compile_context>
chip_gen: v7x
topology: tpu7x:2x2x1
jax: 0.10.0
libtpu: 0.0.40
codegen_flags: <defaults>
</compile_context>

<pallas_src>
import functools

import jax
import jax.numpy as jnp
from jax import lax
from jax.experimental import pallas as pl
from jax.experimental.pallas import tpu as pltpu


_MIB = 1024 * 1024


# ------------------------------ tile selection -------------------------------

def _vmem_capacity_bytes():
    """Generation-aware VMEM capacity; falls back to v7x's 64 MiB if unknown."""
    try:
        return int(pltpu.get_tpu_info().vmem_capacity_bytes)
    except Exception:
        return 64 * _MIB


def _vmem_limit_bytes():
    # Leave headroom below physical VMEM (v7x: 48 MiB, v5e/v6e: 96 MiB).
    return int(min((_vmem_capacity_bytes() * 3) // 4, 96 * _MIB))


def _pick_row_tile(n, rows_cap):
    """Largest legal row tile: the full array if tiny, else a multiple of 8,
    and (when enough rows exist) small enough that the row grid has >= 2
    steps so both of v7x's TensorCores get work under 'parallel' semantics."""
    if n <= 8:
        return n
    tm = min(int(rows_cap), n)
    half = -(-n // 2)
    tm = min(tm, ((half + 7) // 8) * 8)       # keep >= 2 grid steps
    tm = max(8, (tm // 8) * 8)
    return min(tm, n)


def _pick_col_tile(d_out, max_cols):
    """MXU / lane friendly output-column tile (multiple of 256 preferred)."""
    if d_out <= max_cols:
        return d_out                           # full dim is always legal
    for cand in (512, 256, 128):
        if cand <= max_cols and d_out % cand == 0:
            return cand
    return d_out                               # irregular d_out: take it whole


# ----------------------------- LayerNorm kernel -----------------------------

def _layernorm_kernel(x_ref, g_ref, b_ref, o_ref, *, eps, inv_d):
    # Statistics in f32 on the VPU (v5e has no bf16 VPU/EUP); rsqrt -> EUP slot.
    x = x_ref[...].astype(jnp.float32)
    s = jnp.sum(x, axis=-1, keepdims=True)
    sq = jnp.sum(x * x, axis=-1, keepdims=True)
    mean = s * inv_d
    var = jnp.maximum(sq * inv_d - mean * mean, 0.0)
    rstd = lax.rsqrt(var + eps)
    out = (x - mean) * rstd * g_ref[...] + b_ref[...]     # gamma/beta already f32
    o_ref[...] = out.astype(o_ref.dtype)


def layernorm_pallas(x2d, gamma, beta, eps=1e-5,
                     target_tile_bytes=2 * _MIB, max_block_rows=8192):
    """x2d: (N, D); gamma/beta: (D,). LayerNorm over the last axis."""
    n, d = x2d.shape
    rows_cap = min(max_block_rows,
                   max(8, target_tile_bytes // (d * x2d.dtype.itemsize)))
    tm = _pick_row_tile(n, rows_cap)
    g = gamma.astype(jnp.float32).reshape(1, d)   # hoist f32 casts out of kernel
    b = beta.astype(jnp.float32).reshape(1, d)
    kernel = functools.partial(_layernorm_kernel, eps=eps, inv_d=1.0 / d)
    return pl.pallas_call(
        kernel,
        out_shape=jax.ShapeDtypeStruct((n, d), x2d.dtype),
        grid_spec=pltpu.PrefetchScalarGridSpec(
            num_scalar_prefetch=0,
            grid=(pl.cdiv(n, tm),),
            in_specs=[
                pl.BlockSpec((tm, d), lambda i: (i, 0)),
                pl.BlockSpec((1, d), lambda i: (0, 0)),   # gamma stays resident
                pl.BlockSpec((1, d), lambda i: (0, 0)),   # beta stays resident
            ],
            out_specs=pl.BlockSpec((tm, d), lambda i: (i, 0)),
        ),
        compiler_params=pltpu.CompilerParams(
            dimension_semantics=("parallel",),
            vmem_limit_bytes=_vmem_limit_bytes()),
    )(x2d, g, b)


# ----------------------- fused PreNorm + Linear kernel -----------------------

def _prenorm_linear_kernel(x_ref, g_ref, bta_ref, w_ref, b_ref, o_ref, xn_ref,
                           *, eps, inv_d):
    j = pl.program_id(1)

    @pl.when(j == 0)
    def _():
        # Normalize the (tm, D) row tile once per row tile.  Statistics stay in
        # f32; the single f32 -> compute-dtype cast happens on the store into
        # the VMEM scratch that feeds the MXU.
        x = x_ref[...].astype(jnp.float32)
        s = jnp.sum(x, axis=-1, keepdims=True)
        sq = jnp.sum(x * x, axis=-1, keepdims=True)
        mean = s * inv_d
        var = jnp.maximum(sq * inv_d - mean * mean, 0.0)
        rstd = lax.rsqrt(var + eps)
        xn = (x - mean) * rstd * g_ref[...] + bta_ref[...]
        xn_ref[...] = xn.astype(xn_ref.dtype)

    # bf16 x bf16 -> f32 accumulate: native MXU throughput on all generations.
    acc = jnp.dot(xn_ref[...], w_ref[...], preferred_element_type=jnp.float32)
    bias = b_ref[...].astype(jnp.float32)
    o_ref[...] = (acc + bias).astype(o_ref.dtype)


def prenorm_linear_pallas(x2d, gamma, beta, w, b, eps=1e-5,
                          compute_dtype=jnp.bfloat16,
                          max_block_rows=2048, max_block_cols=512):
    """Fused LayerNorm + Linear: (N, D) -> (N, D_out)."""
    n, d = x2d.shape
    d_out = w.shape[1]
    tn = _pick_col_tile(d_out, max_block_cols)

    x_bytes = x2d.dtype.itemsize
    c_bytes = jnp.dtype(compute_dtype).itemsize
    o_bytes = x2d.dtype.itemsize

    # Keep 2x-buffered x/W/out tiles + the xn scratch under ~half the scoped
    # VMEM limit (generation-aware: v7x has 64 MiB physical vs 128 MiB v5e/v6e).
    vmem_limit = _vmem_limit_bytes()
    budget = vmem_limit // 2
    fixed = 2 * d * tn * c_bytes + 2 * tn * 4 + 2 * 2 * d * 4
    per_row = 2 * d * x_bytes + d * c_bytes + 2 * tn * o_bytes
    rows_cap = min(max_block_rows, max(8, (budget - fixed) // per_row))
    tm = _pick_row_tile(n, rows_cap)

    g = gamma.astype(jnp.float32).reshape(1, d)   # hoisted f32 casts
    bt = beta.astype(jnp.float32).reshape(1, d)
    w_c = w.astype(compute_dtype)                 # bf16 W: halves W HBM traffic
    b2 = b.reshape(1, d_out)

    kernel = functools.partial(_prenorm_linear_kernel, eps=eps, inv_d=1.0 / d)
    return pl.pallas_call(
        kernel,
        out_shape=jax.ShapeDtypeStruct((n, d_out), x2d.dtype),
        grid_spec=pltpu.PrefetchScalarGridSpec(
            num_scalar_prefetch=0,
            grid=(pl.cdiv(n, tm), pl.cdiv(d_out, tn)),
            in_specs=[
                pl.BlockSpec((tm, d), lambda i, j: (i, 0)),  # resident over j
                pl.BlockSpec((1, d), lambda i, j: (0, 0)),
                pl.BlockSpec((1, d), lambda i, j: (0, 0)),
                pl.BlockSpec((d, tn), lambda i, j: (0, j)),
                pl.BlockSpec((1, tn), lambda i, j: (0, j)),
            ],
            out_specs=pl.BlockSpec((tm, tn), lambda i, j: (i, j)),
            scratch_shapes=[pltpu.VMEM((tm, d), compute_dtype)],
        ),
        compiler_params=pltpu.CompilerParams(
            dimension_semantics=("parallel", "arbitrary"),
            vmem_limit_bytes=vmem_limit),
    )(x2d, g, bt, w_c, b2)


# --------------------------------- PreNorm ----------------------------------

def prenorm_apply(x, gamma, beta, fn, eps=1e-5, **kwargs):
    """PreNorm.forward: fn(LayerNorm(x), **kwargs) for arbitrary fn."""
    *lead, d = x.shape
    normed = layernorm_pallas(x.reshape(-1, d), gamma, beta, eps=eps)
    return fn(normed.reshape(*lead, d), **kwargs)


def prenorm_linear_apply(x, gamma, beta, w, b, eps=1e-5):
    """PreNorm with fn = Linear(dim, d_out), fully fused in one Pallas kernel."""
    *lead, d = x.shape
    out = prenorm_linear_pallas(x.reshape(-1, d), gamma, beta, w, b, eps=eps)
    return out.reshape(*lead, w.shape[1])


if __name__ == "__main__":
    key = jax.random.PRNGKey(0)
    batch, seq, dim = 2, 8, 128   # dim multiple of 128 -> lane-dense tiles

    k_x, k_w, k_b, k_g, k_bt = jax.random.split(key, 5)
    x = jax.random.normal(k_x, (batch, seq, dim), dtype=jnp.float32)

    # LayerNorm params (non-trivial so the affine path is exercised).
    gamma = 1.0 + 0.1 * jax.random.normal(k_g, (dim,), dtype=jnp.float32)
    beta = 0.1 * jax.random.normal(k_bt, (dim,), dtype=jnp.float32)

    # Wrapped fn: Linear(dim, dim).
    w = jax.random.normal(k_w, (dim, dim), dtype=jnp.float32) * 0.02
    b = jax.random.normal(k_b, (dim,), dtype=jnp.float32) * 0.02

    eps = 1e-5

    # Fused PreNorm + Linear path (single Pallas kernel, bf16 MXU inputs).
    out = prenorm_linear_apply(x, gamma, beta, w, b, eps=eps)
    out = jax.block_until_ready(out)

    # Generic PreNorm path: row-tiled Pallas LayerNorm + arbitrary fn.
    out_generic = prenorm_apply(
        x, gamma, beta, lambda y: jnp.einsum("bsd,de->bse", y, w) + b, eps=eps)
    out_generic = jax.block_until_ready(out_generic)

    # Reference in plain JAX (f32 throughout).
    mean = jnp.mean(x, axis=-1, keepdims=True)
    var = jnp.mean((x - mean) ** 2, axis=-1, keepdims=True)
    ref_norm = (x - mean) / jnp.sqrt(var + eps) * gamma + beta
    ref = jnp.einsum("bsd,de->bse", ref_norm, w) + b

    assert out.shape == (batch, seq, dim)
    # Fused path feeds the MXU bf16 -> slightly looser tolerance.
    assert jnp.allclose(out, ref, atol=2e-2, rtol=2e-2)
    # Generic path: f32 LayerNorm kernel + f32 einsum.
    assert jnp.allclose(out_generic, ref, atol=1e-3, rtol=1e-3)

    print("KERNEL_OK")
</pallas_src>

<mosaic_0001>
module attributes {stable_mosaic.version = 11 : i64} {
  func.func @_prenorm_linear_kernel(%arg0: i32, %arg1: i32, %arg2: memref<8x128xf32, #tpu.memory_space<vmem>>, %arg3: memref<1x128xf32, #tpu.memory_space<vmem>>, %arg4: memref<1x128xf32, #tpu.memory_space<vmem>>, %arg5: memref<128x128xbf16, #tpu.memory_space<vmem>>, %arg6: memref<1x128xf32, #tpu.memory_space<vmem>>, %arg7: memref<8x128xf32, #tpu.memory_space<vmem>>, %arg8: memref<8x128xbf16, #tpu.memory_space<vmem>>) attributes {dimension_semantics = [#tpu.dimension_semantics<parallel>, #tpu.dimension_semantics<arbitrary>], iteration_bounds = array<i64: 2, 1>, scalar_prefetch = 0 : i64, scratch_operands = 1 : i64, tpu.core_type = #tpu.core_type<tc>, window_params = [{transform_indices = @transform_0, window_bounds = array<i64: 8, 128>}, {pipeline_mode = #tpu.pipeline_mode<synchronous>, transform_indices = @transform_1, window_bounds = array<i64: 1, 128>}, {pipeline_mode = #tpu.pipeline_mode<synchronous>, transform_indices = @transform_2, window_bounds = array<i64: 1, 128>}, {transform_indices = @transform_3, window_bounds = array<i64: 128, 128>}, {transform_indices = @transform_4, window_bounds = array<i64: 1, 128>}, {transform_indices = @transform_5, window_bounds = array<i64: 8, 128>}]} {
    %c0_i32 = arith.constant 0 : i32
    %0 = arith.cmpi eq, %arg1, %c0_i32 : i32
    %1 = arith.extui %0 : i1 to i32
    %c0_i32_0 = arith.constant 0 : i32
    %2 = arith.cmpi ne, %1, %c0_i32_0 : i32
    scf.if %2 {
      %c0_8 = arith.constant 0 : index
      %c0_9 = arith.constant 0 : index
      %10 = vector.load %arg2[%c0_8, %c0_9] : memref<8x128xf32, #tpu.memory_space<vmem>>, vector<8x128xf32>
      %cst_10 = arith.constant dense<0.000000e+00> : vector<8xf32>
      %11 = vector.multi_reduction <add>, %10, %cst_10 [1] : vector<8x128xf32> to vector<8xf32>
      %12 = vector.shape_cast %11 : vector<8xf32> to vector<8x1xf32>
      %13 = arith.mulf %10, %10 : vector<8x128xf32>
      %cst_11 = arith.constant dense<0.000000e+00> : vector<8xf32>
      %14 = vector.multi_reduction <add>, %13, %cst_11 [1] : vector<8x128xf32> to vector<8xf32>
      %15 = vector.shape_cast %14 : vector<8xf32> to vector<8x1xf32>
      %cst_12 = arith.constant 7.812500e-03 : f32
      %16 = vector.broadcast %cst_12 : f32 to vector<8x1xf32>
      %17 = arith.mulf %12, %16 : vector<8x1xf32>
      %cst_13 = arith.constant 7.812500e-03 : f32
      %18 = vector.broadcast %cst_13 : f32 to vector<8x1xf32>
      %19 = arith.mulf %15, %18 : vector<8x1xf32>
      %20 = arith.mulf %17, %17 : vector<8x1xf32>
      %21 = arith.subf %19, %20 : vector<8x1xf32>
      %cst_14 = arith.constant 0.000000e+00 : f32
      %22 = vector.broadcast %cst_14 : f32 to vector<8x1xf32>
      %23 = arith.maximumf %21, %22 : vector<8x1xf32>
      %cst_15 = arith.constant 9.99999974E-6 : f32
      %24 = vector.broadcast %cst_15 : f32 to vector<8x1xf32>
      %25 = arith.addf %23, %24 : vector<8x1xf32>
      %26 = math.rsqrt %25 : vector<8x1xf32>
      %27 = vector.broadcast %17 : vector<8x1xf32> to vector<8x128xf32>
      %28 = arith.subf %10, %27 : vector<8x128xf32>
      %29 = vector.broadcast %26 : vector<8x1xf32> to vector<8x128xf32>
      %30 = arith.mulf %28, %29 : vector<8x128xf32>
      %c0_16 = arith.constant 0 : index
      %c0_17 = arith.constant 0 : index
      %31 = vector.load %arg3[%c0_16, %c0_17] : memref<1x128xf32, #tpu.memory_space<vmem>>, vector<1x128xf32>
      %32 = vector.broadcast %31 : vector<1x128xf32> to vector<8x128xf32>
      %33 = arith.mulf %30, %32 : vector<8x128xf32>
      %c0_18 = arith.constant 0 : index
      %c0_19 = arith.constant 0 : index
      %34 = vector.load %arg4[%c0_18, %c0_19] : memref<1x128xf32, #tpu.memory_space<vmem>>, vector<1x128xf32>
      %35 = vector.broadcast %34 : vector<1x128xf32> to vector<8x128xf32>
      %36 = arith.addf %33, %35 : vector<8x128xf32>
      %37 = arith.truncf %36 : vector<8x128xf32> to vector<8x128xbf16>
      %c0_20 = arith.constant 0 : index
      %c0_21 = arith.constant 0 : index
      %38 = vector.load %arg8[%c0_20, %c0_21] : memref<8x128xbf16, #tpu.memory_space<vmem>>, vector<8x128xbf16>
      tpu.vector_store %arg8[%c0_20, %c0_21], %37 {strides = array<i32>} : memref<8x128xbf16, #tpu.memory_space<vmem>>, vector<8x128xbf16>,
    } else {
    }
    %c0 = arith.constant 0 : index
    %c0_1 = arith.constant 0 : index
    %3 = vector.load %arg8[%c0, %c0_1] : memref<8x128xbf16, #tpu.memory_space<vmem>>, vector<8x128xbf16>
    %c0_2 = arith.constant 0 : index
    %c0_3 = arith.constant 0 : index
    %4 = vector.load %arg5[%c0_2, %c0_3] : memref<128x128xbf16, #tpu.memory_space<vmem>>, vector<128x128xbf16>
    %cst = arith.constant dense<0.000000e+00> : vector<8x128xf32>
    %5 = tpu.matmul %3, %4, %cst {dimension_numbers = #tpu.dot_dimension_numbers<[1], [0], [0], [1], [0, 0, 1, 1], [], []>} : vector<8x128xbf16>, vector<128x128xbf16>, vector<8x128xf32> -> vector<8x128xf32>
    %c0_4 = arith.constant 0 : index
    %c0_5 = arith.constant 0 : index
    %6 = vector.load %arg6[%c0_4, %c0_5] : memref<1x128xf32, #tpu.memory_space<vmem>>, vector<1x128xf32>
    %7 = vector.broadcast %6 : vector<1x128xf32> to vector<8x128xf32>
    %8 = arith.addf %5, %7 : vector<8x128xf32>
    %c0_6 = arith.constant 0 : index
    %c0_7 = arith.constant 0 : index
    %9 = vector.load %arg7[%c0_6, %c0_7] : memref<8x128xf32, #tpu.memory_space<vmem>>, vector<8x128xf32>
    tpu.vector_store %arg7[%c0_6, %c0_7], %8 {strides = array<i32>} : memref<8x128xf32, #tpu.memory_space<vmem>>, vector<8x128xf32>,
    return
  }
  func.func @transform_0(%arg0: i32, %arg1: i32) -> (i32, i32) {
    %c0_i32 = arith.constant 0 : i32
    %c0_i32_0 = arith.constant 0 : i32
    return %arg0, %c0_i32 : i32, i32
  }
  func.func @transform_1(%arg0: i32, %arg1: i32) -> (i32, i32) {
    %c0_i32 = arith.constant 0 : i32
    %c0_i32_0 = arith.constant 0 : i32
    %c0_i32_1 = arith.constant 0 : i32
    return %c0_i32, %c0_i32_0 : i32, i32
  }
  func.func @transform_2(%arg0: i32, %arg1: i32) -> (i32, i32) {
    %c0_i32 = arith.constant 0 : i32
    %c0_i32_0 = arith.constant 0 : i32
    %c0_i32_1 = arith.constant 0 : i32
    return %c0_i32, %c0_i32_0 : i32, i32
  }
  func.func @transform_3(%arg0: i32, %arg1: i32) -> (i32, i32) {
    %c0_i32 = arith.constant 0 : i32
    %c0_i32_0 = arith.constant 0 : i32
    return %c0_i32, %arg1 : i32, i32
  }
  func.func @transform_4(%arg0: i32, %arg1: i32) -> (i32, i32) {
    %c0_i32 = arith.constant 0 : i32
    %c0_i32_0 = arith.constant 0 : i32
    return %c0_i32, %arg1 : i32, i32
  }
  func.func @transform_5(%arg0: i32, %arg1: i32) -> (i32, i32) {
    %c0_i32 = arith.constant 0 : i32
    return %arg0, %arg1 : i32, i32
  }
}

</mosaic_0001>

<llo_original>
// kernel: tpu_custom_call.1
$region0: #{tpu_custom_call.1}
  #allocation0 [shape = 'u32[]', space=smem, size = 0x4, offset = 0x4, fixed_abs, tag = 'smem constant byte address 0x4 - core index']
  #allocation1 [shape = 'u32[144,128]{1,0:T(1,128)}', space=vmem, size = 0x12000, scoped, tag = 'internal scratch']
  #allocation2 [shape = 'bf16[8,128]{1,0:T(8,128)(2,1)}', space=vmem, size = 0x800, scoped, tag = 'scratch operand']
  %s0 = inlined_call_operand.hbm [shape: f32[16,128], index: 0, kind: input, shape index: {}]
  %s1 = inlined_call_operand.vmem [shape: f32[1,128], index: 1, kind: input, shape index: {}]
  %s2 = inlined_call_operand.vmem [shape: f32[1,128], index: 2, kind: input, shape index: {}]
  %s3 = inlined_call_operand.hbm [shape: bf16[128,128], index: 3, kind: input, shape index: {}]
  %s4 = inlined_call_operand.vmem [shape: f32[1,128], index: 4, kind: input, shape index: {}]
  %s5 = inlined_call_operand.hbm [shape: f32[16,128], index: 5, kind: output, shape index: {}]
  %s6 = sld [smem:[#allocation0]]
  $region65: #{tpu_custom_call.1} parent=0
    _
  %s8 = ssub.s32 1, %s6
  %s9 = scalar_select 0, %s8, %s6
  $region1: #{tpu_custom_call.1} parent=0
    #allocation3 [shape = 'u8[8192]{0}', space=vmem, size = 0x2000, scoped, tag = 'input window, operand 0']
    #allocation4 [shape = 's32[2]{0}', space=sflag, size = 0x8, scoped, tag = 'scoped memory for tpu_custom_call.1']
    #allocation5 [shape = 's32[2]{0}', space=sflag, size = 0x8, scoped, tag = 'scoped memory for tpu_custom_call.1']
    #allocation6 [shape = 'u8[32768]{0}', space=vmem, size = 0x8000, scoped, tag = 'input window, operand 3, single buffered']
    #allocation7 [shape = 's32[1]{0}', space=sflag, size = 0x4, scoped, tag = 'scoped memory for tpu_custom_call.1']
    #allocation8 [shape = 'u8[8192]{0}', space=vmem, size = 0x2000, scoped, tag = 'output window, operand 0']
    %10 = vsyncpa [#allocation4], 0
    %s11 = scalar_lea.sflag [#allocation4], 1
    %12 = vsyncpa %s11, 0
    %13 = vsyncpa [#allocation7], 0
    %14 = vsyncpa [#allocation5], 0
    %s15 = scalar_lea.sflag [#allocation5], 1
    %16 = vsyncpa %s15, 0
    loop: start=0, step=1, limit=4
    $region2: #{tpu_custom_call.1} parent=1 // loop_pre_header
      _
    $region3: #{tpu_custom_call.1} parent=1 // loop_header
      %s18 = sphi 0, %s22
      %p19 = scmp.ge.s32.totalorder %s18, 4
      %s25 = sphi 0, %s37
      %s26 = sphi 0, %s33
      %s27 = sphi 0, %s25
      %s28 = sphi 0, %s26
      %s29 = sphi 0, %s27
      %s30 = sphi 0, %s28
      %s40 = sphi 0, %s42
      %s43 = sphi 0, %s40
      %s44 = sphi 0, %s43
      %s60 = sphi 0, %s44
      %s64 = sphi 0, %s64
      %s66 = sphi 0, %s64
      %s67 = sphi 0, %s66
      %s81 = sphi 0, %s67
      %s85 = sphi 0, %s85
      %s87 = sphi 0, %s85
      %s88 = sphi 0, %s87
      %s102 = sphi 0, %s88
      %s108 = sphi 0, %s110
      %s111 = sphi 0, %s108
      %s112 = sphi 0, %s111
      %s128 = sphi 0, %s112
      %s134 = sphi 0, %s136
      %s137 = sphi 0, %s134
      %s138 = sphi 0, %s137
      %s154 = sphi 0, %s138
      %s162 = sphi 0, %s164
      %s165 = sphi 0, %s162
      %s166 = sphi 0, %s165
      %s182 = sphi 0, %s166
    $region4: #{tpu_custom_call.1} parent=1 // loop_header_branch
      %21 = sbr.rel (%p19) target = $region8
    $region5: #{tpu_custom_call.1} parent=1 // loop_body
      %s23 = ssub.s32 %s18, 1
      %s24 = ssub.s32 %s18, 2
      %s31 = sadd.s32 1, %s26
      %p32 = scmp.ge.s32.totalorder %s31, 1
      %s33 = scalar_select %p32, 0, %s31
      %s34 = sadd.s32 1, %s25
      %s35 = scalar_select %p32, %s34, %s25
      %p36 = scmp.ge.s32.totalorder %s35, 2
      %s37 = scalar_select %p36, 0, %s35
      %s38 = ssub.s32 %s25, %s37
      %p39 = scmp.eq.s32.totalorder %s38, 0
      %s41 = sadd.s32 %s40, 1
      %s42 = scalar_select %p39, %s40, %s41
      %p45 = pneg %p39
      %p46 = scmp.eq.s32.totalorder %s18, 1
      %p47 = por %p45, %p46
      %p48 = scmp.ne.s32.totalorder %s40, %s43
      %p49 = scmp.eq.s32.totalorder %s18, 0
      %p50 = por %p48, %p49
      %p51 = scmp.ne.s32.totalorder %s40, %s43
      %p52 = scmp.eq.s32.totalorder %s23, 1
      %p53 = por %p51, %p52
      %p54 = scmp.ne.s32.totalorder %s43, %s44
      %p55 = scmp.eq.s32.totalorder %s23, 0
      %p56 = por %p54, %p55
      %p57 = scmp.ne.s32.totalorder %s43, %s44
      %p58 = scmp.eq.s32.totalorder %s24, 1
      %p59 = por %p57, %p58
      %p61 = scmp.ne.s32.totalorder %s44, %s60
      %p62 = scmp.eq.s32.totalorder %s24, 0
      %p63 = por %p61, %p62
      %s65 = sadd.s32 %s64, 1
      %p68 = scmp.eq.s32.totalorder %s18, 1
      %p69 = scmp.ne.s32.totalorder %s64, %s66
      %p70 = scmp.eq.s32.totalorder %s18, 0
      %p71 = por %p69, %p70
      %p72 = scmp.ne.s32.totalorder %s64, %s66
      %p73 = scmp.eq.s32.totalorder %s23, 1
      %p74 = por %p72, %p73
      %p75 = scmp.ne.s32.totalorder %s66, %s67
      %p76 = scmp.eq.s32.totalorder %s23, 0
      %p77 = por %p75, %p76
      %p78 = scmp.ne.s32.totalorder %s66, %s67
      %p79 = scmp.eq.s32.totalorder %s24, 1
      %p80 = por %p78, %p79
      %p82 = scmp.ne.s32.totalorder %s67, %s81
      %p83 = scmp.eq.s32.totalorder %s24, 0
      %p84 = por %p82, %p83
      %s86 = sadd.s32 %s85, 1
      %p89 = scmp.eq.s32.totalorder %s18, 1
      %p90 = scmp.ne.s32.totalorder %s85, %s87
      %p91 = scmp.eq.s32.totalorder %s18, 0
      %p92 = por %p90, %p91
      %p93 = scmp.ne.s32.totalorder %s85, %s87
      %p94 = scmp.eq.s32.totalorder %s23, 1
      %p95 = por %p93, %p94
      %p96 = scmp.ne.s32.totalorder %s87, %s88
      %p97 = scmp.eq.s32.totalorder %s23, 0
      %p98 = por %p96, %p97
      %p99 = scmp.ne.s32.totalorder %s87, %s88
      %p100 = scmp.eq.s32.totalorder %s24, 1
      %p101 = por %p99, %p100
      %p103 = scmp.ne.s32.totalorder %s88, %s102
      %p104 = scmp.eq.s32.totalorder %s24, 0
      %p105 = por %p103, %p104
      %s106 = ssub.s32 %s26, %s33
      %p107 = scmp.eq.s32.totalorder %s106, 0
      %s109 = sadd.s32 %s108, 1
      %s110 = scalar_select %p107, %s108, %s109
      %p113 = pneg %p107
      %p114 = scmp.eq.s32.totalorder %s18, 1
      %p115 = por %p113, %p114
      %p116 = scmp.ne.s32.totalorder %s108, %s111
      %p117 = scmp.eq.s32.totalorder %s18, 0
      %p118 = por %p116, %p117
      %p119 = scmp.ne.s32.totalorder %s108, %s111
      %p120 = scmp.eq.s32.totalorder %s23, 1
      %p121 = por %p119, %p120
      %p122 = scmp.ne.s32.totalorder %s111, %s112
      %p123 = scmp.eq.s32.totalorder %s23, 0
      %p124 = por %p122, %p123
      %p125 = scmp.ne.s32.totalorder %s111, %s112
      %p126 = scmp.eq.s32.totalorder %s24, 1
      %p127 = por %p125, %p126
      %p129 = scmp.ne.s32.totalorder %s112, %s128
      %p130 = scmp.eq.s32.totalorder %s24, 0
      %p131 = por %p129, %p130
      %s132 = ssub.s32 %s26, %s33
      %p133 = scmp.eq.s32.totalorder %s132, 0
      %s135 = sadd.s32 %s134, 1
      %s136 = scalar_select %p133, %s134, %s135
      %p139 = pneg %p133
      %p140 = scmp.eq.s32.totalorder %s18, 1
      %p141 = por %p139, %p140
      %p142 = scmp.ne.s32.totalorder %s134, %s137
      %p143 = scmp.eq.s32.totalorder %s18, 0
      %p144 = por %p142, %p143
      %p145 = scmp.ne.s32.totalorder %s134, %s137
      %p146 = scmp.eq.s32.totalorder %s23, 1
      %p147 = por %p145, %p146
      %p148 = scmp.ne.s32.totalorder %s137, %s138
      %p149 = scmp.eq.s32.totalorder %s23, 0
      %p150 = por %p148, %p149
      %p151 = scmp.ne.s32.totalorder %s137, %s138
      %p152 = scmp.eq.s32.totalorder %s24, 1
      %p153 = por %p151, %p152
      %p155 = scmp.ne.s32.totalorder %s138, %s154
      %p156 = scmp.eq.s32.totalorder %s24, 0
      %p157 = por %p155, %p156
      %s158 = ssub.s32 %s25, %s37
      %s159 = ssub.s32 %s26, %s33
      %s160 = sor.u32 %s158, %s159
      %p161 = scmp.eq.s32.totalorder %s160, 0
      %s163 = sadd.s32 %s162, 1
      %s164 = scalar_select %p161, %s162, %s163
      %p167 = pneg %p161
      %p168 = scmp.eq.s32.totalorder %s18, 1
      %p169 = por %p167, %p168
      %p170 = scmp.ne.s32.totalorder %s162, %s165
      %p171 = scmp.eq.s32.totalorder %s18, 0
      %p172 = por %p170, %p171
      %p173 = scmp.ne.s32.totalorder %s162, %s165
      %p174 = scmp.eq.s32.totalorder %s23, 1
      %p175 = por %p173, %p174
      %p176 = scmp.ne.s32.totalorder %s165, %s166
      %p177 = scmp.eq.s32.totalorder %s23, 0
      %p178 = por %p176, %p177
      %p179 = scmp.ne.s32.totalorder %s165, %s166
      %p180 = scmp.eq.s32.totalorder %s24, 1
      %p181 = por %p179, %p180
      %p183 = scmp.ne.s32.totalorder %s166, %s182
      %p184 = scmp.eq.s32.totalorder %s24, 0
      %p185 = por %p183, %p184
      %p186 = scmp.le.s32.totalorder 1, %s18
      %p187 = scmp.lt.s32.totalorder %s18, 3
      %p188 = pnand %p186, %p187
      %p189 = pneg %p188
      // Predicated region
      $region9: #{tpu_custom_call.1} parent=5 // pred_check
        _
      $region10: #{tpu_custom_call.1} parent=5 // pred_check_branch
        %191 = sbr.rel (%p188) target = $region12
      $region11: #{tpu_custom_call.1} parent=5 // pred_region
        %s192 = ssub.s32 %s18, 1
        // Predicated region
        $region13: #{tpu_custom_call.1} parent=11 // pred_check
          %p193 = pneg %p77
        $region14: #{tpu_custom_call.1} parent=11 // pred_check_branch
          %195 = sbr.rel (%p193) target = $region16
        $region15: #{tpu_custom_call.1} parent=11 // pred_region
          _
        $region16: #{tpu_custom_call.1} parent=11 // pred_fallthru
          _
        // Predicated region
        $region17: #{tpu_custom_call.1} parent=11 // pred_check
          %p196 = pneg %p98
        $region18: #{tpu_custom_call.1} parent=11 // pred_check_branch
          %198 = sbr.rel (%p196) target = $region20
        $region19: #{tpu_custom_call.1} parent=11 // pred_region
          _
        $region20: #{tpu_custom_call.1} parent=11 // pred_fallthru
          _
        // Predicated region
        $region21: #{tpu_custom_call.1} parent=11 // pred_check
          %p199 = pneg %p124
        $region22: #{tpu_custom_call.1} parent=11 // pred_check_branch
          %201 = sbr.rel (%p199) target = $region24
        $region23: #{tpu_custom_call.1} parent=11 // pred_region
          %s203 = ssub.s32 1024, 1024
          %204 = vsyncadd [#allocation7], %s203
          %s205 = smul.addr %s28, 64
          %s206 = scalar_lea.hbm %s3, %s205
          %s207 = sshll.u32 [#allocation6], 4
          %s208 = int_to_ptr.vmem [resolvable:$true] %s207
          %213 = dma.hbm_to_vmem [thread:$0]  %s206, 1024, %s208, [#allocation7], 64, 64, 4
        $region24: #{tpu_custom_call.1} parent=11 // pred_fallthru
          _
        // Predicated region
        $region25: #{tpu_custom_call.1} parent=11 // pred_check
          %p214 = pneg %p150
        $region26: #{tpu_custom_call.1} parent=11 // pred_check_branch
          %216 = sbr.rel (%p214) target = $region28
        $region27: #{tpu_custom_call.1} parent=11 // pred_region
          %p217 = scmp.lt.s32.totalorder %s28, 0
          %s218 = scalar_select %p217, %s28, 0
          %s219 = scalar_lea.vmem %s4, %s218
        $region28: #{tpu_custom_call.1} parent=11 // pred_fallthru
          _
      $region12: #{tpu_custom_call.1} parent=5 // pred_fallthru
        _
      %p220 = scmp.lt.s32.totalorder %s18, 2
      // Predicated region
      $region29: #{tpu_custom_call.1} parent=5 // pred_check
        %p221 = pneg %p220
      $region30: #{tpu_custom_call.1} parent=5 // pred_check_branch
        %223 = sbr.rel (%p221) target = $region32
      $region31: #{tpu_custom_call.1} parent=5 // pred_region
        // Predicated region
        $region33: #{tpu_custom_call.1} parent=31 // pred_check
          %p224 = pneg %p50
        $region34: #{tpu_custom_call.1} parent=31 // pred_check_branch
          %226 = sbr.rel (%p224) target = $region36
        $region35: #{tpu_custom_call.1} parent=31 // pred_region
          %s227 = sand.u32 %s40, 1
          %s228 = scalar_lea.sflag [#allocation4], %s227
          %s229 = sand.u32 %s40, 1
          %s230 = smul.addr %s229, 8
          %s231 = scalar_lea.vmem [#allocation3], %s230
          %s233 = ssub.s32 128, 128
          %234 = vsyncadd %s228, %s233
          %s235 = smul.addr %s25, 128
          %s236 = scalar_lea.hbm %s0, %s235
          %s238 = sshll.u32 %s231, 4
          %s239 = int_to_ptr.vmem [resolvable:$true] %s238
          %241 = dma.hbm_to_vmem [thread:$0]  %s236, 128, %s239, %s228
        $region36: #{tpu_custom_call.1} parent=31 // pred_fallthru
          _
      $region32: #{tpu_custom_call.1} parent=5 // pred_fallthru
        _
      %p242 = scmp.le.s32.totalorder 1, %s18
      %p243 = scmp.lt.s32.totalorder %s18, 3
      %p244 = pnand %p242, %p243
      %p245 = pneg %p244
      // Predicated region
      $region37: #{tpu_custom_call.1} parent=5 // pred_check
        _
      $region38: #{tpu_custom_call.1} parent=5 // pred_check_branch
        %247 = sbr.rel (%p244) target = $region40
      $region39: #{tpu_custom_call.1} parent=5 // pred_region
        %s248 = ssub.s32 %s18, 1
        %s249 = sand.u32 %s43, 1
        %s250 = scalar_lea.sflag [#allocation4], %s249
        %s251 = sand.u32 %s43, 1
        %s252 = smul.addr %s251, 8
        %s253 = scalar_lea.vmem [#allocation3], %s252
        // Predicated region
        $region41: #{tpu_custom_call.1} parent=39 // pred_check
          %p254 = pneg %p56
        $region42: #{tpu_custom_call.1} parent=39 // pred_check_branch
          %256 = sbr.rel (%p254) target = $region44
        $region43: #{tpu_custom_call.1} parent=39 // pred_region
          %257 = dma.done %s250, 128
        $region44: #{tpu_custom_call.1} parent=39 // pred_fallthru
          _
        // Predicated region
        $region45: #{tpu_custom_call.1} parent=39 // pred_check
          %p258 = pneg %p124
        $region46: #{tpu_custom_call.1} parent=39 // pred_check_branch
          %260 = sbr.rel (%p258) target = $region48
        $region47: #{tpu_custom_call.1} parent=39 // pred_region
          %261 = dma.done [#allocation7], 1024
        $region48: #{tpu_custom_call.1} parent=39 // pred_fallthru
          _
        %s262 = sand.u32 %s43, 1
        %s263 = scalar_lea.sflag [#allocation4], %s262
        %s264 = sand.u32 %s43, 1
        %s265 = smul.addr %s264, 8
        %s266 = scalar_lea.vmem [#allocation3], %s265
        %p267 = pneg %p56
        %p268 = pneg %p53
        %p269 = pneg %p77
        %p270 = pneg %p74
        %p271 = pneg %p98
        %p272 = pneg %p95
        %p273 = pneg %p124
        %p274 = pneg %p121
        %p275 = scmp.lt.s32.totalorder %s28, 0
        %s276 = scalar_select %p275, %s28, 0
        %s277 = scalar_lea.vmem %s4, %s276
        %p278 = pneg %p150
        %p279 = pneg %p147
        %p280 = pneg %p178
        %p281 = pneg %p175
        %s282 = sand.u32 %s165, 1
        %s283 = scalar_lea.sflag [#allocation5], %s282
        %s284 = sand.u32 %s165, 1
        %s285 = smul.addr %s284, 8
        %s286 = scalar_lea.vmem [#allocation8], %s285
        %p287 = scmp.lt.s32.totalorder %s28, 0
        %s288 = scalar_select %p287, %s28, 0
        %s289 = scalar_lea.vmem %s4, %s288
        %p291 = scmp.eq.s32.totalorder %s28, 0
        // Predicated region
        $region49: #{tpu_custom_call.1} parent=39 // pred_check
          %p292 = pneg %p291
        $region50: #{tpu_custom_call.1} parent=39 // pred_check_branch
          %294 = sbr.rel (%p292) target = $region52
        $region51: #{tpu_custom_call.1} parent=39 // pred_region
          %v295 = vld [vmem:[%s253] sm:$0xff]
          %296 = vadd.xlane.f32.xlu0 %v295
          %v297 = vpop.xlane.xlu0 %296
          %v298 = vmul.f32 %v295, %v295
          %299 = vadd.xlane.f32.xlu0 %v298
          %v300 = vpop.xlane.xlu0 %299
          %v301 = vmul.f32 %v297, 0.0078125
          %v302 = vmul.f32 %v300, 0.0078125
          %v303 = vmul.f32 %v301, %v301
          %v304 = vsub.f32 %v302, %v303
          %v305 = vmax.f32 %v304, 0.0
          %v306 = vadd.f32 %v305, 1e-05
          %v307 = vrsqrt.pop %v306
          %v308 = vsub.f32 %v295, %v301
          %v309 = vmul.f32 %v308, %v307
          %v310 = vld [vmem:[%s1] sm:$0x1]
          %v312 = vlaneseq
          %v313 = vshrl.u32 %v312, 7
          %v314 = vsub.s32 0, %v313
          %v315 = vrot.slane %v310, %v314
          %v317 = vmul.f32 %v309, %v315
          %v318 = vld [vmem:[%s2] sm:$0x1]
          %v320 = vlaneseq
          %v321 = vshrl.u32 %v320, 7
          %v322 = vsub.s32 0, %v321
          %v323 = vrot.slane %v318, %v322
          %v325 = vadd.f32 %v317, %v323
          %v326 = vpack.c.bf16 %v325, %v325
          %327 = vst [vmem:[#allocation2] sm:$0xf] %v326
        $region52: #{tpu_custom_call.1} parent=39 // pred_fallthru
          _
        %v328 = vld [vmem:[#allocation2] sm:$0xf]
        %v329 = vld [vmem:[#allocation6] sm:$0xf]
        %v330 = vld [vmem:[#allocation6 + $0x4] sm:$0xf]
        %v331 = vld [vmem:[#allocation6 + $0x8] sm:$0xf]
        %v332 = vld [vmem:[#allocation6 + $0xc] sm:$0xf]
        %v333 = vld [vmem:[#allocation6 + $0x10] sm:$0xf]
        %v334 = vld [vmem:[#allocation6 + $0x14] sm:$0xf]
        %v335 = vld [vmem:[#allocation6 + $0x18] sm:$0xf]
        %v336 = vld [vmem:[#allocation6 + $0x1c] sm:$0xf]
        %v337 = vld [vmem:[#allocation6 + $0x20] sm:$0xf]
        %v338 = vld [vmem:[#allocation6 + $0x24] sm:$0xf]
        %v339 = vld [vmem:[#allocation6 + $0x28] sm:$0xf]
        %v340 = vld [vmem:[#allocation6 + $0x2c] sm:$0xf]
        %v341 = vld [vmem:[#allocation6 + $0x30] sm:$0xf]
        %v342 = vld [vmem:[#allocation6 + $0x34] sm:$0xf]
        %v343 = vld [vmem:[#allocation6 + $0x38] sm:$0xf]
        %v344 = vld [vmem:[#allocation6 + $0x3c] sm:$0xf]
        %v345 = vld [vmem:[%s289] sm:$0x1]
        %v347 = vlaneseq
        %v348 = vshrl.u32 %v347, 7
        %v349 = vsub.s32 0, %v348
        %v350 = vrot.slane %v345, %v349
        %v368 = vunpack.c.l.b16 %v329
        %v369 = vunpack.c.l.b16 %v330
        %v370 = vunpack.c.l.b16 %v331
        %v371 = vunpack.c.l.b16 %v332
        %v372 = vunpack.c.l.b16 %v333
        %v373 = vunpack.c.l.b16 %v334
        %v374 = vunpack.c.l.b16 %v335
        %v375 = vunpack.c.l.b16 %v336
        %v376 = vunpack.c.l.b16 %v337
        %v377 = vunpack.c.l.b16 %v338
        %v378 = vunpack.c.l.b16 %v339
        %v379 = vunpack.c.l.b16 %v340
        %v380 = vunpack.c.l.b16 %v341
        %v381 = vunpack.c.l.b16 %v342
        %v382 = vunpack.c.l.b16 %v343
        %v383 = vunpack.c.l.b16 %v344
        %v384 = vpack.c.b16 %v369, %v368
        %v385 = vpack.c.b16 %v371, %v370
        %v386 = vpack.c.b16 %v373, %v372
        %v387 = vpack.c.b16 %v375, %v374
        %v388 = vpack.c.b16 %v377, %v376
        %v389 = vpack.c.b16 %v379, %v378
        %v390 = vpack.c.b16 %v381, %v380
        %v391 = vpack.c.b16 %v383, %v382
        %400 = vmatprep.subr.bf16.mxu0 0
        %401 = vmatpush1.bf16.msra.mxu0 %v384
        %402 = vmatprep.subr.bf16.mxu0 0
        %403 = vmatpush1.bf16.msra.mxu0 %v385
        %404 = vmatprep.subr.bf16.mxu0 0
        %405 = vmatpush1.bf16.msra.mxu0 %v386
        %406 = vmatprep.subr.bf16.mxu0 0
        %407 = vmatpush1.bf16.msra.mxu0 %v387
        %408 = vmatprep.subr.bf16.mxu0 0
        %409 = vmatpush1.bf16.msra.mxu0 %v388
        %410 = vmatprep.subr.bf16.mxu0 0
        %411 = vmatpush1.bf16.msra.mxu0 %v389
        %412 = vmatprep.subr.bf16.mxu0 0
        %413 = vmatpush1.bf16.msra.mxu0 %v390
        %414 = vmatprep.subr.bf16.mxu0 0
        %415 = vmatpush1.bf16.msra.mxu0 %v391
        %416 = vmatprep.subr.bf16.mxu0 0
        %417 = vmatpush1.bf16.msra.mxu0 0
        %418 = vmatprep.subr.bf16.mxu0 0
        %419 = vmatpush1.bf16.msra.mxu0 0
        %420 = vmatprep.subr.bf16.mxu0 0
        %421 = vmatpush1.bf16.msra.mxu0 0
        %422 = vmatprep.subr.bf16.mxu0 0
        %423 = vmatpush1.bf16.msra.mxu0 0
        %424 = vmatprep.subr.bf16.mxu0 0
        %425 = vmatpush1.bf16.msra.mxu0 0
        %426 = vmatprep.subr.bf16.mxu0 0
        %427 = vmatpush1.bf16.msra.mxu0 0
        %428 = vmatprep.subr.bf16.mxu0 0
        %429 = vmatpush1.bf16.msra.mxu0 0
        %430 = vmatprep.subr.bf16.mxu0 0
        %431 = vmatpush1.bf16.msra.mxu0 0
        %432 = vmatprep.mubr.bf16.mxu0 0
        %433 = vmatmul.mubr.bf16.gmra.mrb[0].mxu0 %v328
        %v434 = vpop.f32.mrb[0].mxu0
        %v435 = vadd.f32 %v350, %v434
        %v436 = vpop.f32.mrb[0].mxu0
        %v437 = vpop.f32.mrb[0].mxu0
        %v438 = vpop.f32.mrb[0].mxu0
        %439 = vdwg.mxu0
        %440 = vst [vmem:[%s286] sm:$0xff] %v435
        %s441 = sand.u32 %s165, 1
        %s442 = scalar_lea.sflag [#allocation5], %s441
        %s443 = sand.u32 %s165, 1
        %s444 = smul.addr %s443, 8
        %s445 = scalar_lea.vmem [#allocation8], %s444
        // Predicated region
        $region53: #{tpu_custom_call.1} parent=39 // pred_check
          %p446 = pneg %p175
        $region54: #{tpu_custom_call.1} parent=39 // pred_check_branch
          %448 = sbr.rel (%p446) target = $region56
        $region55: #{tpu_custom_call.1} parent=39 // pred_region
          %s450 = ssub.s32 128, 128
          %451 = vsyncadd %s442, %s450
          %s452 = sadd.s32 %s28, %s27
          %s453 = smul.addr %s452, 128
          %s454 = scalar_lea.hbm %s5, %s453
          %s456 = sshll.u32 %s445, 4
          %s457 = int_to_ptr.vmem [resolvable:$true] %s456
          %459 = dma.vmem_to_hbm [thread:$0]  %s457, 128, %s454, %s442
        $region56: #{tpu_custom_call.1} parent=39 // pred_fallthru
          _
      $region40: #{tpu_custom_call.1} parent=5 // pred_fallthru
        _
      %p460 = scmp.le.s32.totalorder 2, %s18
      // Predicated region
      $region57: #{tpu_custom_call.1} parent=5 // pred_check
        %p461 = pneg %p460
      $region58: #{tpu_custom_call.1} parent=5 // pred_check_branch
        %463 = sbr.rel (%p461) target = $region60
      $region59: #{tpu_custom_call.1} parent=5 // pred_region
        %s464 = ssub.s32 %s18, 2
        // Predicated region
        $region61: #{tpu_custom_call.1} parent=59 // pred_check
          %p465 = pneg %p181
        $region62: #{tpu_custom_call.1} parent=59 // pred_check_branch
          %467 = sbr.rel (%p465) target = $region64
        $region63: #{tpu_custom_call.1} parent=59 // pred_region
          %s468 = sand.u32 %s166, 1
          %s469 = scalar_lea.sflag [#allocation5], %s468
          %s470 = sand.u32 %s166, 1
          %s471 = smul.addr %s470, 8
          %s472 = scalar_lea.vmem [#allocation8], %s471
          %473 = dma.done %s469, 128
        $region64: #{tpu_custom_call.1} parent=59 // pred_fallthru
          _
      $region60: #{tpu_custom_call.1} parent=5 // pred_fallthru
        _
    $region6: #{tpu_custom_call.1} parent=1 // loop_footer
      %s22 = sadd.s32 1, %s18
    $region7: #{tpu_custom_call.1} parent=1 // loop_footer_branch
      %17 = sbr.rel target = $region3
    $region8: #{tpu_custom_call.1} parent=1 // loop_exit
      _
    %474 = vsyncpa [#allocation4], 1
    %s475 = scalar_lea.sflag [#allocation4], 1
    %476 = vsyncpa %s475, 1
    %477 = vsyncpa [#allocation7], 1
    %478 = vsyncpa [#allocation5], 1
    %s479 = scalar_lea.sflag [#allocation5], 1
    %480 = vsyncpa %s479, 1

</llo_original>
